<compile_context>
chip_gen: v7x
topology: tpu7x:2x2x1
jax: 0.10.0
libtpu: 0.0.40
codegen_flags: <defaults>
</compile_context>

<pallas_src>
import jax
import jax.numpy as jnp
from jax.experimental import pallas as pl
from jax.experimental.pallas import tpu as pltpu

LN_EPS = 1e-5


def _cdiv(a, b):
    return -(-a // b)


def _round_up(a, b):
    return _cdiv(a, b) * b


def _patch_merge_kernel(x_ref, w_ref, b_ref, o_ref):
    # x_ref : (TR, 2, Wo, 2C)  TR output-image rows; dim 1 = even/odd input row;
    #                          last dim packs [x(.,2w,:) | x(.,2w+1,:)] channels.
    # w_ref : (2, 2C, Cout)    gamma-folded reduction weight, K split even/odd.
    # b_ref : (1, Cout) f32    beta @ W (folded LayerNorm bias).
    # o_ref : (TR*Wo, Cout)
    tr, _, wo, c2 = x_ref.shape
    c4 = 2 * c2
    m = tr * wo

    # Free static slices of the single input block (no strided DMA, no copy).
    xe = x_ref[:, 0].astype(jnp.float32)          # (TR, Wo, 2C)  even rows
    xo = x_ref[:, 1].astype(jnp.float32)          # (TR, Wo, 2C)  odd rows

    # One-pass LayerNorm statistics over the 4C merged channels (split xe|xo).
    inv_c4 = 1.0 / c4
    s1 = jnp.sum(xe, axis=-1, keepdims=True) + jnp.sum(xo, axis=-1, keepdims=True)
    s2 = (jnp.sum(xe * xe, axis=-1, keepdims=True)
          + jnp.sum(xo * xo, axis=-1, keepdims=True))
    mean = s1 * inv_c4
    var = jnp.maximum(s2 * inv_c4 - mean * mean, 0.0)
    inv = jax.lax.rsqrt(var + LN_EPS)

    # Normalize in the natural 3-D layout; flatten only the downcast MXU
    # operands (halves relayout bytes when Wo % 8 != 0).  Partial last block:
    # the garbage rows flow through LN/matmul but are masked on store.
    mm_dtype = w_ref.dtype
    ye = ((xe - mean) * inv).astype(mm_dtype).reshape(m, c2)
    yo = ((xo - mean) * inv).astype(mm_dtype).reshape(m, c2)

    # Linear(4C -> 2C, bias folded): two K=2C MXU matmuls, f32 accumulation.
    acc = jnp.dot(ye, w_ref[0], preferred_element_type=jnp.float32)
    acc = acc + jnp.dot(yo, w_ref[1], preferred_element_type=jnp.float32)
    acc = acc + b_ref[...]                        # (1, Cout) broadcast
    o_ref[...] = acc.astype(o_ref.dtype)


def _pick_tile_rows(rows, per_row_bytes, budget_bytes, max_tile_rows):
    """Largest multiple-of-8 row tile fitting the budget; even grid if tiled."""
    cap = min(budget_bytes // max(per_row_bytes, 1), max_tile_rows)
    cap = max(8, (cap // 8) * 8)
    if rows <= cap:
        return rows                                # whole problem, one step
    # >= 2 grid steps: pick an even step count (v7x: balance the two TCs).
    n = 2
    while _round_up(_cdiv(rows, n), 8) > cap:
        n += 2
    return _round_up(_cdiv(rows, n), 8)


def patch_merging_2d(x, gamma, beta, weight_t, *,
                     cast_to_bf16=False,
                     vmem_budget_bytes=32 * 1024 * 1024,
                     max_tile_rows=512):
    """PatchMerging2D forward.

    x        : (B, H, W, C)
    gamma    : (4C,)  LayerNorm weight
    beta     : (4C,)  LayerNorm bias
    weight_t : (4C, 2C) = reduction.weight.T
    returns  : (B, H//2, W//2, 2C)
    """
    B, H, W, C = x.shape
    if H % 2 or W % 2:
        # PyTorch SHAPE_FIX path: truncate to even spatial dims (rare; costs
        # one extra HBM copy for the slice, matching the module's semantics).
        H, W = 2 * (H // 2), 2 * (W // 2)
        x = x[:, :H, :W, :]

    Ho, Wo = H // 2, W // 2
    C2, Cout = 2 * C, 2 * C
    rows = B * Ho

    # Free (view) reshape: row r = (b, ho); dim 1 selects even/odd input image
    # row; last dim packs the two horizontal neighbours' channels.
    xr = x.reshape(rows, 2, Wo, C2)

    # Fold LayerNorm affine into the reduction weight (trace time, f32 math),
    # then permute torch channel order [x0,x1,x2,x3] -> kernel order
    # [x0,x2 | x1,x3] and split K into the even/odd halves.
    w_f32 = weight_t.astype(jnp.float32)
    gamma_f32 = gamma.astype(jnp.float32)
    beta_f32 = beta.astype(jnp.float32)
    w_folded = w_f32 * gamma_f32[:, None]                        # (4C, Cout)
    bias_out = (beta_f32 @ w_f32).reshape(1, Cout)               # (1, Cout) f32

    mm_dtype = jnp.bfloat16 if cast_to_bf16 else weight_t.dtype
    perm = jnp.array([0, 2, 1, 3], dtype=jnp.int32)
    wstk = (w_folded.reshape(4, C, Cout)[perm]
            .reshape(2, C2, Cout).astype(mm_dtype))

    # ---- VMEM budget -> tile_rows ----------------------------------------
    in_isz = jnp.dtype(x.dtype).itemsize
    mm_isz = jnp.dtype(mm_dtype).itemsize
    per_row = (2 * (2 * Wo * C2) * in_isz          # input block  (x2 pipeline)
               + 2 * (Wo * Cout) * in_isz          # output block (x2 pipeline)
               + Wo * C2 * (2 * 4 + 2 * mm_isz)    # xe/xo f32 + ye/yo mm-dtype
               + Wo * Cout * 4)                    # f32 accumulator
    w_resident = 2 * (2 * C2 * Cout * mm_isz) + 2 * (Cout * 4)  # dbl-buffered
    tile_rows = _pick_tile_rows(rows, per_row,
                                vmem_budget_bytes - w_resident, max_tile_rows)
    grid = (_cdiv(rows, tile_rows),)

    needed = w_resident + tile_rows * per_row
    vmem_limit = int(max(needed * 3 // 2 + (4 << 20), 32 << 20))

    out2d = pl.pallas_call(
        _patch_merge_kernel,
        out_shape=jax.ShapeDtypeStruct((rows * Wo, Cout), x.dtype),
        grid_spec=pltpu.PrefetchScalarGridSpec(
            num_scalar_prefetch=0,
            grid=grid,
            in_specs=[
                # one contiguous HBM slab per step (even + odd rows together)
                pl.BlockSpec((tile_rows, 2, Wo, C2), lambda i: (i, 0, 0, 0)),
                # constant index_map -> stays resident across the grid
                pl.BlockSpec((2, C2, Cout), lambda i: (0, 0, 0)),   # weight
                pl.BlockSpec((1, Cout), lambda i: (0, 0)),          # bias
            ],
            out_specs=pl.BlockSpec((tile_rows * Wo, Cout), lambda i: (i, 0)),
        ),
        compiler_params=pltpu.CompilerParams(
            dimension_semantics=("parallel",),
            vmem_limit_bytes=vmem_limit,
        ),
    )(xr, wstk, bias_out)

    return out2d.reshape(B, Ho, Wo, Cout)


def _reference(x, gamma, beta, weight_t):
    """Pure-JAX mirror of the PyTorch module (f32 math)."""
    B, H, W, C = x.shape
    x0 = x[:, 0::2, 0::2, :]
    x1 = x[:, 1::2, 0::2, :]
    x2 = x[:, 0::2, 1::2, :]
    x3 = x[:, 1::2, 1::2, :]
    if H % 2 or W % 2:
        h, w = H // 2, W // 2
        x0, x1, x2, x3 = (t[:, :h, :w, :] for t in (x0, x1, x2, x3))
    xm = jnp.concatenate([x0, x1, x2, x3], axis=-1).astype(jnp.float32)
    mean = jnp.mean(xm, axis=-1, keepdims=True)
    var = jnp.mean((xm - mean) ** 2, axis=-1, keepdims=True)
    xn = (xm - mean) / jnp.sqrt(var + LN_EPS)
    y = xn * gamma.astype(jnp.float32) + beta.astype(jnp.float32)
    return jnp.dot(y, weight_t.astype(jnp.float32))


if __name__ == "__main__":
    key = jax.random.PRNGKey(0)
    kx, kw, kg, kb, kx2 = jax.random.split(key, 5)

    # Module params (dim = 4): LayerNorm(4*dim) affine + Linear(4*dim, 2*dim).
    C = 4
    gamma = 1.0 + 0.1 * jax.random.normal(kg, (4 * C,), dtype=jnp.float32)
    beta = 0.05 * jax.random.normal(kb, (4 * C,), dtype=jnp.float32)
    bound = 1.0 / (4 * C) ** 0.5
    w = jax.random.uniform(kw, (2 * C, 4 * C), minval=-bound, maxval=bound,
                           dtype=jnp.float32)         # reduction.weight
    weight_t = w.T                                     # (4C, 2C)

    # ---- Test 1: even H/W, exact f32 path, single grid step ---------------
    B, H, W = 2, 16, 16
    x = jax.random.normal(kx, (B, H, W, C), dtype=jnp.float32)
    out = jax.block_until_ready(patch_merging_2d(x, gamma, beta, weight_t))
    ref = _reference(x, gamma, beta, weight_t)
    assert out.shape == (B, H // 2, W // 2, 2 * C), out.shape
    assert jnp.allclose(out, ref, atol=1e-4, rtol=1e-4), \
        float(jnp.max(jnp.abs(out - ref)))

    # ---- Test 2: odd H/W (SHAPE_FIX), Wo=7, multi-step grid with a partial
    # last block, bf16 MXU operands -----------------------------------------
    B2, H2, W2 = 2, 13, 15
    x2 = jax.random.normal(kx2, (B2, H2, W2, C), dtype=jnp.float32)
    out2 = jax.block_until_ready(
        patch_merging_2d(x2, gamma, beta, weight_t,
                         cast_to_bf16=True, max_tile_rows=8))
    ref2 = _reference(x2, gamma, beta, weight_t)
    assert out2.shape == (B2, H2 // 2, W2 // 2, 2 * C), out2.shape
    assert jnp.allclose(out2, ref2, atol=5e-2, rtol=1e-2), \
        float(jnp.max(jnp.abs(out2 - ref2)))

    print("KERNEL_OK")
</pallas_src>

<mosaic_0001>
module attributes {stable_mosaic.version = 11 : i64} {
  func.func @_patch_merge_kernel(%arg0: i32, %arg1: memref<16x2x8x8xf32, #tpu.memory_space<vmem>>, %arg2: memref<2x8x8xf32, #tpu.memory_space<vmem>>, %arg3: memref<1x8xf32, #tpu.memory_space<vmem>>, %arg4: memref<128x8xf32, #tpu.memory_space<vmem>>) attributes {dimension_semantics = [#tpu.dimension_semantics<parallel>], iteration_bounds = array<i64: 1>, scalar_prefetch = 0 : i64, scratch_operands = 0 : i64, tpu.core_type = #tpu.core_type<tc>, window_params = [{transform_indices = @transform_0, window_bounds = array<i64: 16, 2, 8, 8>}, {pipeline_mode = #tpu.pipeline_mode<synchronous>, transform_indices = @transform_1, window_bounds = array<i64: 2, 8, 8>}, {pipeline_mode = #tpu.pipeline_mode<synchronous>, transform_indices = @transform_2, window_bounds = array<i64: 1, 8>}, {transform_indices = @transform_3, window_bounds = array<i64: 128, 8>}]} {
    %c0 = arith.constant 0 : index
    %c0_0 = arith.constant 0 : index
    %c0_1 = arith.constant 0 : index
    %c0_2 = arith.constant 0 : index
    %0 = vector.load %arg1[%c0, %c0_0, %c0_1, %c0_2] : memref<16x2x8x8xf32, #tpu.memory_space<vmem>>, vector<16x1x8x8xf32>
    %1 = vector.shape_cast %0 : vector<16x1x8x8xf32> to vector<16x8x8xf32>
    %c0_3 = arith.constant 0 : index
    %c1 = arith.constant 1 : index
    %c0_4 = arith.constant 0 : index
    %c0_5 = arith.constant 0 : index
    %2 = vector.load %arg1[%c0_3, %c1, %c0_4, %c0_5] : memref<16x2x8x8xf32, #tpu.memory_space<vmem>>, vector<16x1x8x8xf32>
    %3 = vector.shape_cast %2 : vector<16x1x8x8xf32> to vector<16x8x8xf32>
    %cst = arith.constant dense<0.000000e+00> : vector<16x8xf32>
    %4 = vector.multi_reduction <add>, %1, %cst [2] : vector<16x8x8xf32> to vector<16x8xf32>
    %5 = vector.shape_cast %4 : vector<16x8xf32> to vector<16x8x1xf32>
    %cst_6 = arith.constant dense<0.000000e+00> : vector<16x8xf32>
    %6 = vector.multi_reduction <add>, %3, %cst_6 [2] : vector<16x8x8xf32> to vector<16x8xf32>
    %7 = vector.shape_cast %6 : vector<16x8xf32> to vector<16x8x1xf32>
    %8 = arith.addf %5, %7 : vector<16x8x1xf32>
    %9 = arith.mulf %1, %1 : vector<16x8x8xf32>
    %cst_7 = arith.constant dense<0.000000e+00> : vector<16x8xf32>
    %10 = vector.multi_reduction <add>, %9, %cst_7 [2] : vector<16x8x8xf32> to vector<16x8xf32>
    %11 = vector.shape_cast %10 : vector<16x8xf32> to vector<16x8x1xf32>
    %12 = arith.mulf %3, %3 : vector<16x8x8xf32>
    %cst_8 = arith.constant dense<0.000000e+00> : vector<16x8xf32>
    %13 = vector.multi_reduction <add>, %12, %cst_8 [2] : vector<16x8x8xf32> to vector<16x8xf32>
    %14 = vector.shape_cast %13 : vector<16x8xf32> to vector<16x8x1xf32>
    %15 = arith.addf %11, %14 : vector<16x8x1xf32>
    %cst_9 = arith.constant 6.250000e-02 : f32
    %16 = vector.broadcast %cst_9 : f32 to vector<16x8x1xf32>
    %17 = arith.mulf %8, %16 : vector<16x8x1xf32>
    %cst_10 = arith.constant 6.250000e-02 : f32
    %18 = vector.broadcast %cst_10 : f32 to vector<16x8x1xf32>
    %19 = arith.mulf %15, %18 : vector<16x8x1xf32>
    %20 = arith.mulf %17, %17 : vector<16x8x1xf32>
    %21 = arith.subf %19, %20 : vector<16x8x1xf32>
    %cst_11 = arith.constant 0.000000e+00 : f32
    %22 = vector.broadcast %cst_11 : f32 to vector<16x8x1xf32>
    %23 = arith.maximumf %21, %22 : vector<16x8x1xf32>
    %cst_12 = arith.constant 9.99999974E-6 : f32
    %24 = vector.broadcast %cst_12 : f32 to vector<16x8x1xf32>
    %25 = arith.addf %23, %24 : vector<16x8x1xf32>
    %26 = math.rsqrt %25 : vector<16x8x1xf32>
    %27 = vector.broadcast %17 : vector<16x8x1xf32> to vector<16x8x8xf32>
    %28 = arith.subf %1, %27 : vector<16x8x8xf32>
    %29 = vector.broadcast %26 : vector<16x8x1xf32> to vector<16x8x8xf32>
    %30 = arith.mulf %28, %29 : vector<16x8x8xf32>
    %31 = vector.shape_cast %30 : vector<16x8x8xf32> to vector<128x8xf32>
    %32 = vector.broadcast %17 : vector<16x8x1xf32> to vector<16x8x8xf32>
    %33 = arith.subf %3, %32 : vector<16x8x8xf32>
    %34 = vector.broadcast %26 : vector<16x8x1xf32> to vector<16x8x8xf32>
    %35 = arith.mulf %33, %34 : vector<16x8x8xf32>
    %36 = vector.shape_cast %35 : vector<16x8x8xf32> to vector<128x8xf32>
    %c0_13 = arith.constant 0 : index
    %c0_14 = arith.constant 0 : index
    %c0_15 = arith.constant 0 : index
    %37 = vector.load %arg2[%c0_13, %c0_14, %c0_15] : memref<2x8x8xf32, #tpu.memory_space<vmem>>, vector<1x8x8xf32>
    %38 = vector.shape_cast %37 : vector<1x8x8xf32> to vector<8x8xf32>
    %cst_16 = arith.constant dense<0.000000e+00> : vector<128x8xf32>
    %39 = tpu.matmul %31, %38, %cst_16 {dimension_numbers = #tpu.dot_dimension_numbers<[1], [0], [0], [1], [0, 0, 1, 1], [], []>} : vector<128x8xf32>, vector<8x8xf32>, vector<128x8xf32> -> vector<128x8xf32>
    %c1_17 = arith.constant 1 : index
    %c0_18 = arith.constant 0 : index
    %c0_19 = arith.constant 0 : index
    %40 = vector.load %arg2[%c1_17, %c0_18, %c0_19] : memref<2x8x8xf32, #tpu.memory_space<vmem>>, vector<1x8x8xf32>
    %41 = vector.shape_cast %40 : vector<1x8x8xf32> to vector<8x8xf32>
    %cst_20 = arith.constant dense<0.000000e+00> : vector<128x8xf32>
    %42 = tpu.matmul %36, %41, %cst_20 {dimension_numbers = #tpu.dot_dimension_numbers<[1], [0], [0], [1], [0, 0, 1, 1], [], []>} : vector<128x8xf32>, vector<8x8xf32>, vector<128x8xf32> -> vector<128x8xf32>
    %43 = arith.addf %39, %42 : vector<128x8xf32>
    %c0_21 = arith.constant 0 : index
    %c0_22 = arith.constant 0 : index
    %44 = vector.load %arg3[%c0_21, %c0_22] : memref<1x8xf32, #tpu.memory_space<vmem>>, vector<1x8xf32>
    %45 = vector.broadcast %44 : vector<1x8xf32> to vector<128x8xf32>
    %46 = arith.addf %43, %45 : vector<128x8xf32>
    %c0_23 = arith.constant 0 : index
    %c0_24 = arith.constant 0 : index
    %47 = vector.load %arg4[%c0_23, %c0_24] : memref<128x8xf32, #tpu.memory_space<vmem>>, vector<128x8xf32>
    tpu.vector_store %arg4[%c0_23, %c0_24], %46 {strides = array<i32>} : memref<128x8xf32, #tpu.memory_space<vmem>>, vector<128x8xf32>,
    return
  }
  func.func @transform_0(%arg0: i32) -> (i32, i32, i32, i32) {
    %c0_i32 = arith.constant 0 : i32
    %c0_i32_0 = arith.constant 0 : i32
    %c0_i32_1 = arith.constant 0 : i32
    %c0_i32_2 = arith.constant 0 : i32
    return %arg0, %c0_i32, %c0_i32_0, %c0_i32_1 : i32, i32, i32, i32
  }
  func.func @transform_1(%arg0: i32) -> (i32, i32, i32) {
    %c0_i32 = arith.constant 0 : i32
    %c0_i32_0 = arith.constant 0 : i32
    %c0_i32_1 = arith.constant 0 : i32
    %c0_i32_2 = arith.constant 0 : i32
    return %c0_i32, %c0_i32_0, %c0_i32_1 : i32, i32, i32
  }
  func.func @transform_2(%arg0: i32) -> (i32, i32) {
    %c0_i32 = arith.constant 0 : i32
    %c0_i32_0 = arith.constant 0 : i32
    %c0_i32_1 = arith.constant 0 : i32
    return %c0_i32, %c0_i32_0 : i32, i32
  }
  func.func @transform_3(%arg0: i32) -> (i32, i32) {
    %c0_i32 = arith.constant 0 : i32
    %c0_i32_0 = arith.constant 0 : i32
    return %arg0, %c0_i32 : i32, i32
  }
}

</mosaic_0001>

<llo_original>
// kernel: tpu_custom_call.1
$region0: #{tpu_custom_call.1}
  #allocation0 [shape = 'u32[]', space=smem, size = 0x4, offset = 0x4, fixed_abs, tag = 'smem constant byte address 0x4 - core index']
  #allocation1 [shape = 'u32[144,128]{1,0:T(1,128)}', space=vmem, size = 0x12000, scoped, tag = 'internal scratch']
  %s0 = inlined_call_operand.vmem [shape: f32[16,2,8,8], index: 0, kind: input, shape index: {}]
  %s1 = inlined_call_operand.vmem [shape: f32[2,8,8], index: 1, kind: input, shape index: {}]
  %s2 = inlined_call_operand.vmem [shape: f32[1,8], index: 2, kind: input, shape index: {}]
  %s3 = inlined_call_operand.vmem [shape: f32[128,8], index: 3, kind: output, shape index: {}]
  %s4 = sld [smem:[#allocation0]]
  $region22: #{tpu_custom_call.1} parent=0
    _
  %s6 = ssub.s32 1, %s4
  %s7 = scalar_select 0, %s6, %s4
  // Predicated region
  $region2: #{tpu_custom_call.1} parent=0 // pred_check
    _
  $region3: #{tpu_custom_call.1} parent=0 // pred_check_branch
    %9 = sbr.rel (0) target = $region5
  $region4: #{tpu_custom_call.1} parent=0 // pred_region
    _
  $region5: #{tpu_custom_call.1} parent=0 // pred_fallthru
    _
  // Predicated region
  $region6: #{tpu_custom_call.1} parent=0 // pred_check
    _
  $region7: #{tpu_custom_call.1} parent=0 // pred_check_branch
    %11 = sbr.rel (0) target = $region9
  $region8: #{tpu_custom_call.1} parent=0 // pred_region
    _
  $region9: #{tpu_custom_call.1} parent=0 // pred_fallthru
    _
  // Predicated region
  $region10: #{tpu_custom_call.1} parent=0 // pred_check
    _
  $region11: #{tpu_custom_call.1} parent=0 // pred_check_branch
    %13 = sbr.rel (0) target = $region13
  $region12: #{tpu_custom_call.1} parent=0 // pred_region
    _
  $region13: #{tpu_custom_call.1} parent=0 // pred_fallthru
    _
  %v14 = vld [vmem:[%s0] sm:$0xff]
  %v15 = vld [vmem:[%s0 + $0x10] sm:$0xff]
  %v16 = vld [vmem:[%s0 + $0x20] sm:$0xff]
  %v17 = vld [vmem:[%s0 + $0x30] sm:$0xff]
  %v18 = vld [vmem:[%s0 + $0x40] sm:$0xff]
  %v19 = vld [vmem:[%s0 + $0x50] sm:$0xff]
  %v20 = vld [vmem:[%s0 + $0x60] sm:$0xff]
  %v21 = vld [vmem:[%s0 + $0x70] sm:$0xff]
  %v22 = vld [vmem:[%s0 + $0x80] sm:$0xff]
  %v23 = vld [vmem:[%s0 + $0x90] sm:$0xff]
  %v24 = vld [vmem:[%s0 + $0xa0] sm:$0xff]
  %v25 = vld [vmem:[%s0 + $0xb0] sm:$0xff]
  %v26 = vld [vmem:[%s0 + $0xc0] sm:$0xff]
  %v27 = vld [vmem:[%s0 + $0xd0] sm:$0xff]
  %v28 = vld [vmem:[%s0 + $0xe0] sm:$0xff]
  %v29 = vld [vmem:[%s0 + $0xf0] sm:$0xff]
  %s30 = scalar_lea.vmem %s0, 8
  %v31 = vld [vmem:[%s30] sm:$0xff]
  %v32 = vld [vmem:[%s30 + $0x10] sm:$0xff]
  %v33 = vld [vmem:[%s30 + $0x20] sm:$0xff]
  %v34 = vld [vmem:[%s30 + $0x30] sm:$0xff]
  %v35 = vld [vmem:[%s30 + $0x40] sm:$0xff]
  %v36 = vld [vmem:[%s30 + $0x50] sm:$0xff]
  %v37 = vld [vmem:[%s30 + $0x60] sm:$0xff]
  %v38 = vld [vmem:[%s30 + $0x70] sm:$0xff]
  %v39 = vld [vmem:[%s30 + $0x80] sm:$0xff]
  %v40 = vld [vmem:[%s30 + $0x90] sm:$0xff]
  %v41 = vld [vmem:[%s30 + $0xa0] sm:$0xff]
  %v42 = vld [vmem:[%s30 + $0xb0] sm:$0xff]
  %v43 = vld [vmem:[%s30 + $0xc0] sm:$0xff]
  %v44 = vld [vmem:[%s30 + $0xd0] sm:$0xff]
  %v45 = vld [vmem:[%s30 + $0xe0] sm:$0xff]
  %v46 = vld [vmem:[%s30 + $0xf0] sm:$0xff]
  %vm47 = vcmask 64512
  %v48 = vsel %vm47, %v14, 0.0
  %49 = vadd.xlane.f32.xlu0 %v48
  %v50 = vpop.xlane.xlu0 %49
  %v51 = vsel %vm47, %v15, 0.0
  %52 = vadd.xlane.f32.xlu0 %v51
  %v53 = vpop.xlane.xlu0 %52
  %v54 = vsel %vm47, %v16, 0.0
  %55 = vadd.xlane.f32.xlu0 %v54
  %v56 = vpop.xlane.xlu0 %55
  %v57 = vsel %vm47, %v17, 0.0
  %58 = vadd.xlane.f32.xlu0 %v57
  %v59 = vpop.xlane.xlu0 %58
  %v60 = vsel %vm47, %v18, 0.0
  %61 = vadd.xlane.f32.xlu0 %v60
  %v62 = vpop.xlane.xlu0 %61
  %v63 = vsel %vm47, %v19, 0.0
  %64 = vadd.xlane.f32.xlu0 %v63
  %v65 = vpop.xlane.xlu0 %64
  %v66 = vsel %vm47, %v20, 0.0
  %67 = vadd.xlane.f32.xlu0 %v66
  %v68 = vpop.xlane.xlu0 %67
  %v69 = vsel %vm47, %v21, 0.0
  %70 = vadd.xlane.f32.xlu0 %v69
  %v71 = vpop.xlane.xlu0 %70
  %v72 = vsel %vm47, %v22, 0.0
  %73 = vadd.xlane.f32.xlu0 %v72
  %v74 = vpop.xlane.xlu0 %73
  %v75 = vsel %vm47, %v23, 0.0
  %76 = vadd.xlane.f32.xlu0 %v75
  %v77 = vpop.xlane.xlu0 %76
  %v78 = vsel %vm47, %v24, 0.0
  %79 = vadd.xlane.f32.xlu0 %v78
  %v80 = vpop.xlane.xlu0 %79
  %v81 = vsel %vm47, %v25, 0.0
  %82 = vadd.xlane.f32.xlu0 %v81
  %v83 = vpop.xlane.xlu0 %82
  %v84 = vsel %vm47, %v26, 0.0
  %85 = vadd.xlane.f32.xlu0 %v84
  %v86 = vpop.xlane.xlu0 %85
  %v87 = vsel %vm47, %v27, 0.0
  %88 = vadd.xlane.f32.xlu0 %v87
  %v89 = vpop.xlane.xlu0 %88
  %v90 = vsel %vm47, %v28, 0.0
  %91 = vadd.xlane.f32.xlu0 %v90
  %v92 = vpop.xlane.xlu0 %91
  %v93 = vsel %vm47, %v29, 0.0
  %94 = vadd.xlane.f32.xlu0 %v93
  %v95 = vpop.xlane.xlu0 %94
  %v96 = vsel %vm47, %v31, 0.0
  %97 = vadd.xlane.f32.xlu0 %v96
  %v98 = vpop.xlane.xlu0 %97
  %v99 = vsel %vm47, %v32, 0.0
  %100 = vadd.xlane.f32.xlu0 %v99
  %v101 = vpop.xlane.xlu0 %100
  %v102 = vsel %vm47, %v33, 0.0
  %103 = vadd.xlane.f32.xlu0 %v102
  %v104 = vpop.xlane.xlu0 %103
  %v105 = vsel %vm47, %v34, 0.0
  %106 = vadd.xlane.f32.xlu0 %v105
  %v107 = vpop.xlane.xlu0 %106
  %v108 = vsel %vm47, %v35, 0.0
  %109 = vadd.xlane.f32.xlu0 %v108
  %v110 = vpop.xlane.xlu0 %109
  %v111 = vsel %vm47, %v36, 0.0
  %112 = vadd.xlane.f32.xlu0 %v111
  %v113 = vpop.xlane.xlu0 %112
  %v114 = vsel %vm47, %v37, 0.0
  %115 = vadd.xlane.f32.xlu0 %v114
  %v116 = vpop.xlane.xlu0 %115
  %v117 = vsel %vm47, %v38, 0.0
  %118 = vadd.xlane.f32.xlu0 %v117
  %v119 = vpop.xlane.xlu0 %118
  %v120 = vsel %vm47, %v39, 0.0
  %121 = vadd.xlane.f32.xlu0 %v120
  %v122 = vpop.xlane.xlu0 %121
  %v123 = vsel %vm47, %v40, 0.0
  %124 = vadd.xlane.f32.xlu0 %v123
  %v125 = vpop.xlane.xlu0 %124
  %v126 = vsel %vm47, %v41, 0.0
  %127 = vadd.xlane.f32.xlu0 %v126
  %v128 = vpop.xlane.xlu0 %127
  %v129 = vsel %vm47, %v42, 0.0
  %130 = vadd.xlane.f32.xlu0 %v129
  %v131 = vpop.xlane.xlu0 %130
  %v132 = vsel %vm47, %v43, 0.0
  %133 = vadd.xlane.f32.xlu0 %v132
  %v134 = vpop.xlane.xlu0 %133
  %v135 = vsel %vm47, %v44, 0.0
  %136 = vadd.xlane.f32.xlu0 %v135
  %v137 = vpop.xlane.xlu0 %136
  %v138 = vsel %vm47, %v45, 0.0
  %139 = vadd.xlane.f32.xlu0 %v138
  %v140 = vpop.xlane.xlu0 %139
  %v141 = vsel %vm47, %v46, 0.0
  %142 = vadd.xlane.f32.xlu0 %v141
  %v143 = vpop.xlane.xlu0 %142
  %v144 = vadd.f32 %v50, %v98
  %v145 = vadd.f32 %v53, %v101
  %v146 = vadd.f32 %v56, %v104
  %v147 = vadd.f32 %v59, %v107
  %v148 = vadd.f32 %v62, %v110
  %v149 = vadd.f32 %v65, %v113
  %v150 = vadd.f32 %v68, %v116
  %v151 = vadd.f32 %v71, %v119
  %v152 = vadd.f32 %v74, %v122
  %v153 = vadd.f32 %v77, %v125
  %v154 = vadd.f32 %v80, %v128
  %v155 = vadd.f32 %v83, %v131
  %v156 = vadd.f32 %v86, %v134
  %v157 = vadd.f32 %v89, %v137
  %v158 = vadd.f32 %v92, %v140
  %v159 = vadd.f32 %v95, %v143
  %v160 = vmul.f32 %v14, %v14
  %v161 = vmul.f32 %v15, %v15
  %v162 = vmul.f32 %v16, %v16
  %v163 = vmul.f32 %v17, %v17
  %v164 = vmul.f32 %v18, %v18
  %v165 = vmul.f32 %v19, %v19
  %v166 = vmul.f32 %v20, %v20
  %v167 = vmul.f32 %v21, %v21
  %v168 = vmul.f32 %v22, %v22
  %v169 = vmul.f32 %v23, %v23
  %v170 = vmul.f32 %v24, %v24
  %v171 = vmul.f32 %v25, %v25
  %v172 = vmul.f32 %v26, %v26
  %v173 = vmul.f32 %v27, %v27
  %v174 = vmul.f32 %v28, %v28
  %v175 = vmul.f32 %v29, %v29
  %v176 = vsel %vm47, %v160, 0.0
  %177 = vadd.xlane.f32.xlu0 %v176
  %v178 = vpop.xlane.xlu0 %177
  %v179 = vsel %vm47, %v161, 0.0
  %180 = vadd.xlane.f32.xlu0 %v179
  %v181 = vpop.xlane.xlu0 %180
  %v182 = vsel %vm47, %v162, 0.0
  %183 = vadd.xlane.f32.xlu0 %v182
  %v184 = vpop.xlane.xlu0 %183
  %v185 = vsel %vm47, %v163, 0.0
  %186 = vadd.xlane.f32.xlu0 %v185
  %v187 = vpop.xlane.xlu0 %186
  %v188 = vsel %vm47, %v164, 0.0
  %189 = vadd.xlane.f32.xlu0 %v188
  %v190 = vpop.xlane.xlu0 %189
  %v191 = vsel %vm47, %v165, 0.0
  %192 = vadd.xlane.f32.xlu0 %v191
  %v193 = vpop.xlane.xlu0 %192
  %v194 = vsel %vm47, %v166, 0.0
  %195 = vadd.xlane.f32.xlu0 %v194
  %v196 = vpop.xlane.xlu0 %195
  %v197 = vsel %vm47, %v167, 0.0
  %198 = vadd.xlane.f32.xlu0 %v197
  %v199 = vpop.xlane.xlu0 %198
  %v200 = vsel %vm47, %v168, 0.0
  %201 = vadd.xlane.f32.xlu0 %v200
  %v202 = vpop.xlane.xlu0 %201
  %v203 = vsel %vm47, %v169, 0.0
  %204 = vadd.xlane.f32.xlu0 %v203
  %v205 = vpop.xlane.xlu0 %204
  %v206 = vsel %vm47, %v170, 0.0
  %207 = vadd.xlane.f32.xlu0 %v206
  %v208 = vpop.xlane.xlu0 %207
  %v209 = vsel %vm47, %v171, 0.0
  %210 = vadd.xlane.f32.xlu0 %v209
  %v211 = vpop.xlane.xlu0 %210
  %v212 = vsel %vm47, %v172, 0.0
  %213 = vadd.xlane.f32.xlu0 %v212
  %v214 = vpop.xlane.xlu0 %213
  %v215 = vsel %vm47, %v173, 0.0
  %216 = vadd.xlane.f32.xlu0 %v215
  %v217 = vpop.xlane.xlu0 %216
  %v218 = vsel %vm47, %v174, 0.0
  %219 = vadd.xlane.f32.xlu0 %v218
  %v220 = vpop.xlane.xlu0 %219
  %v221 = vsel %vm47, %v175, 0.0
  %222 = vadd.xlane.f32.xlu0 %v221
  %v223 = vpop.xlane.xlu0 %222
  %v224 = vmul.f32 %v31, %v31
  %v225 = vmul.f32 %v32, %v32
  %v226 = vmul.f32 %v33, %v33
  %v227 = vmul.f32 %v34, %v34
  %v228 = vmul.f32 %v35, %v35
  %v229 = vmul.f32 %v36, %v36
  %v230 = vmul.f32 %v37, %v37
  %v231 = vmul.f32 %v38, %v38
  %v232 = vmul.f32 %v39, %v39
  %v233 = vmul.f32 %v40, %v40
  %v234 = vmul.f32 %v41, %v41
  %v235 = vmul.f32 %v42, %v42
  %v236 = vmul.f32 %v43, %v43
  %v237 = vmul.f32 %v44, %v44
  %v238 = vmul.f32 %v45, %v45
  %v239 = vmul.f32 %v46, %v46
  %v240 = vsel %vm47, %v224, 0.0
  %241 = vadd.xlane.f32.xlu0 %v240
  %v242 = vpop.xlane.xlu0 %241
  %v243 = vsel %vm47, %v225, 0.0
  %244 = vadd.xlane.f32.xlu0 %v243
  %v245 = vpop.xlane.xlu0 %244
  %v246 = vsel %vm47, %v226, 0.0
  %247 = vadd.xlane.f32.xlu0 %v246
  %v248 = vpop.xlane.xlu0 %247
  %v249 = vsel %vm47, %v227, 0.0
  %250 = vadd.xlane.f32.xlu0 %v249
  %v251 = vpop.xlane.xlu0 %250
  %v252 = vsel %vm47, %v228, 0.0
  %253 = vadd.xlane.f32.xlu0 %v252
  %v254 = vpop.xlane.xlu0 %253
  %v255 = vsel %vm47, %v229, 0.0
  %256 = vadd.xlane.f32.xlu0 %v255
  %v257 = vpop.xlane.xlu0 %256
  %v258 = vsel %vm47, %v230, 0.0
  %259 = vadd.xlane.f32.xlu0 %v258
  %v260 = vpop.xlane.xlu0 %259
  %v261 = vsel %vm47, %v231, 0.0
  %262 = vadd.xlane.f32.xlu0 %v261
  %v263 = vpop.xlane.xlu0 %262
  %v264 = vsel %vm47, %v232, 0.0
  %265 = vadd.xlane.f32.xlu0 %v264
  %v266 = vpop.xlane.xlu0 %265
  %v267 = vsel %vm47, %v233, 0.0
  %268 = vadd.xlane.f32.xlu0 %v267
  %v269 = vpop.xlane.xlu0 %268
  %v270 = vsel %vm47, %v234, 0.0
  %271 = vadd.xlane.f32.xlu0 %v270
  %v272 = vpop.xlane.xlu0 %271
  %v273 = vsel %vm47, %v235, 0.0
  %274 = vadd.xlane.f32.xlu0 %v273
  %v275 = vpop.xlane.xlu0 %274
  %v276 = vsel %vm47, %v236, 0.0
  %277 = vadd.xlane.f32.xlu0 %v276
  %v278 = vpop.xlane.xlu0 %277
  %v279 = vsel %vm47, %v237, 0.0
  %280 = vadd.xlane.f32.xlu0 %v279
  %v281 = vpop.xlane.xlu0 %280
  %v282 = vsel %vm47, %v238, 0.0
  %283 = vadd.xlane.f32.xlu0 %v282
  %v284 = vpop.xlane.xlu0 %283
  %v285 = vsel %vm47, %v239, 0.0
  %286 = vadd.xlane.f32.xlu0 %v285
  %v287 = vpop.xlane.xlu0 %286
  %v288 = vadd.f32 %v178, %v242
  %v289 = vadd.f32 %v181, %v245
  %v290 = vadd.f32 %v184, %v248
  %v291 = vadd.f32 %v187, %v251
  %v292 = vadd.f32 %v190, %v254
  %v293 = vadd.f32 %v193, %v257
  %v294 = vadd.f32 %v196, %v260
  %v295 = vadd.f32 %v199, %v263
  %v296 = vadd.f32 %v202, %v266
  %v297 = vadd.f32 %v205, %v269
  %v298 = vadd.f32 %v208, %v272
  %v299 = vadd.f32 %v211, %v275
  %v300 = vadd.f32 %v214, %v278
  %v301 = vadd.f32 %v217, %v281
  %v302 = vadd.f32 %v220, %v284
  %v303 = vadd.f32 %v223, %v287
  %v304 = vmul.f32 %v144, 0.0625
  %v305 = vmul.f32 %v145, 0.0625
  %v306 = vmul.f32 %v146, 0.0625
  %v307 = vmul.f32 %v147, 0.0625
  %v308 = vmul.f32 %v148, 0.0625
  %v309 = vmul.f32 %v149, 0.0625
  %v310 = vmul.f32 %v150, 0.0625
  %v311 = vmul.f32 %v151, 0.0625
  %v312 = vmul.f32 %v152, 0.0625
  %v313 = vmul.f32 %v153, 0.0625
  %v314 = vmul.f32 %v154, 0.0625
  %v315 = vmul.f32 %v155, 0.0625
  %v316 = vmul.f32 %v156, 0.0625
  %v317 = vmul.f32 %v157, 0.0625
  %v318 = vmul.f32 %v158, 0.0625
  %v319 = vmul.f32 %v159, 0.0625
  %v320 = vmul.f32 %v288, 0.0625
  %v321 = vmul.f32 %v289, 0.0625
  %v322 = vmul.f32 %v290, 0.0625
  %v323 = vmul.f32 %v291, 0.0625
  %v324 = vmul.f32 %v292, 0.0625
  %v325 = vmul.f32 %v293, 0.0625
  %v326 = vmul.f32 %v294, 0.0625
  %v327 = vmul.f32 %v295, 0.0625
  %v328 = vmul.f32 %v296, 0.0625
  %v329 = vmul.f32 %v297, 0.0625
  %v330 = vmul.f32 %v298, 0.0625
  %v331 = vmul.f32 %v299, 0.0625
  %v332 = vmul.f32 %v300, 0.0625
  %v333 = vmul.f32 %v301, 0.0625
  %v334 = vmul.f32 %v302, 0.0625
  %v335 = vmul.f32 %v303, 0.0625
  %v336 = vmul.f32 %v304, %v304
  %v337 = vmul.f32 %v305, %v305
  %v338 = vmul.f32 %v306, %v306
  %v339 = vmul.f32 %v307, %v307
  %v340 = vmul.f32 %v308, %v308
  %v341 = vmul.f32 %v309, %v309
  %v342 = vmul.f32 %v310, %v310
  %v343 = vmul.f32 %v311, %v311
  %v344 = vmul.f32 %v312, %v312
  %v345 = vmul.f32 %v313, %v313
  %v346 = vmul.f32 %v314, %v314
  %v347 = vmul.f32 %v315, %v315
  %v348 = vmul.f32 %v316, %v316
  %v349 = vmul.f32 %v317, %v317
  %v350 = vmul.f32 %v318, %v318
  %v351 = vmul.f32 %v319, %v319
  %v352 = vsub.f32 %v320, %v336
  %v353 = vsub.f32 %v321, %v337
  %v354 = vsub.f32 %v322, %v338
  %v355 = vsub.f32 %v323, %v339
  %v356 = vsub.f32 %v324, %v340
  %v357 = vsub.f32 %v325, %v341
  %v358 = vsub.f32 %v326, %v342
  %v359 = vsub.f32 %v327, %v343
  %v360 = vsub.f32 %v328, %v344
  %v361 = vsub.f32 %v329, %v345
  %v362 = vsub.f32 %v330, %v346
  %v363 = vsub.f32 %v331, %v347
  %v364 = vsub.f32 %v332, %v348
  %v365 = vsub.f32 %v333, %v349
  %v366 = vsub.f32 %v334, %v350
  %v367 = vsub.f32 %v335, %v351
  %v368 = vmax.f32 %v352, 0.0
  %v369 = vmax.f32 %v353, 0.0
  %v370 = vmax.f32 %v354, 0.0
  %v371 = vmax.f32 %v355, 0.0
  %v372 = vmax.f32 %v356, 0.0
  %v373 = vmax.f32 %v357, 0.0
  %v374 = vmax.f32 %v358, 0.0
  %v375 = vmax.f32 %v359, 0.0
  %v376 = vmax.f32 %v360, 0.0
  %v377 = vmax.f32 %v361, 0.0
  %v378 = vmax.f32 %v362, 0.0
  %v379 = vmax.f32 %v363, 0.0
  %v380 = vmax.f32 %v364, 0.0
  %v381 = vmax.f32 %v365, 0.0
  %v382 = vmax.f32 %v366, 0.0
  %v383 = vmax.f32 %v367, 0.0
  %v384 = vadd.f32 %v368, 1e-05
  %v385 = vadd.f32 %v369, 1e-05
  %v386 = vadd.f32 %v370, 1e-05
  %v387 = vadd.f32 %v371, 1e-05
  %v388 = vadd.f32 %v372, 1e-05
  %v389 = vadd.f32 %v373, 1e-05
  %v390 = vadd.f32 %v374, 1e-05
  %v391 = vadd.f32 %v375, 1e-05
  %v392 = vadd.f32 %v376, 1e-05
  %v393 = vadd.f32 %v377, 1e-05
  %v394 = vadd.f32 %v378, 1e-05
  %v395 = vadd.f32 %v379, 1e-05
  %v396 = vadd.f32 %v380, 1e-05
  %v397 = vadd.f32 %v381, 1e-05
  %v398 = vadd.f32 %v382, 1e-05
  %v399 = vadd.f32 %v383, 1e-05
  %v400 = vrsqrt.pop %v384
  %v401 = vrsqrt.pop %v385
  %v402 = vrsqrt.pop %v386
  %v403 = vrsqrt.pop %v387
  %v404 = vrsqrt.pop %v388
  %v405 = vrsqrt.pop %v389
  %v406 = vrsqrt.pop %v390
  %v407 = vrsqrt.pop %v391
  %v408 = vrsqrt.pop %v392
  %v409 = vrsqrt.pop %v393
  %v410 = vrsqrt.pop %v394
  %v411 = vrsqrt.pop %v395
  %v412 = vrsqrt.pop %v396
  %v413 = vrsqrt.pop %v397
  %v414 = vrsqrt.pop %v398
  %v415 = vrsqrt.pop %v399
  %v416 = vsub.f32 %v14, %v304
  %v417 = vsub.f32 %v15, %v305
  %v418 = vsub.f32 %v16, %v306
  %v419 = vsub.f32 %v17, %v307
  %v420 = vsub.f32 %v18, %v308
  %v421 = vsub.f32 %v19, %v309
  %v422 = vsub.f32 %v20, %v310
  %v423 = vsub.f32 %v21, %v311
  %v424 = vsub.f32 %v22, %v312
  %v425 = vsub.f32 %v23, %v313
  %v426 = vsub.f32 %v24, %v314
  %v427 = vsub.f32 %v25, %v315
  %v428 = vsub.f32 %v26, %v316
  %v429 = vsub.f32 %v27, %v317
  %v430 = vsub.f32 %v28, %v318
  %v431 = vsub.f32 %v29, %v319
  %v432 = vmul.f32 %v416, %v400
  %v433 = vmul.f32 %v417, %v401
  %v434 = vmul.f32 %v418, %v402
  %v435 = vmul.f32 %v419, %v403
  %v436 = vmul.f32 %v420, %v404
  %v437 = vmul.f32 %v421, %v405
  %v438 = vmul.f32 %v422, %v406
  %v439 = vmul.f32 %v423, %v407
  %v440 = vmul.f32 %v424, %v408
  %v441 = vmul.f32 %v425, %v409
  %v442 = vmul.f32 %v426, %v410
  %v443 = vmul.f32 %v427, %v411
  %v444 = vmul.f32 %v428, %v412
  %v445 = vmul.f32 %v429, %v413
  %v446 = vmul.f32 %v430, %v414
  %v447 = vmul.f32 %v431, %v415
  %v448 = vsub.f32 %v31, %v304
  %v449 = vsub.f32 %v32, %v305
  %v450 = vsub.f32 %v33, %v306
  %v451 = vsub.f32 %v34, %v307
  %v452 = vsub.f32 %v35, %v308
  %v453 = vsub.f32 %v36, %v309
  %v454 = vsub.f32 %v37, %v310
  %v455 = vsub.f32 %v38, %v311
  %v456 = vsub.f32 %v39, %v312
  %v457 = vsub.f32 %v40, %v313
  %v458 = vsub.f32 %v41, %v314
  %v459 = vsub.f32 %v42, %v315
  %v460 = vsub.f32 %v43, %v316
  %v461 = vsub.f32 %v44, %v317
  %v462 = vsub.f32 %v45, %v318
  %v463 = vsub.f32 %v46, %v319
  %v464 = vmul.f32 %v448, %v400
  %v465 = vmul.f32 %v449, %v401
  %v466 = vmul.f32 %v450, %v402
  %v467 = vmul.f32 %v451, %v403
  %v468 = vmul.f32 %v452, %v404
  %v469 = vmul.f32 %v453, %v405
  %v470 = vmul.f32 %v454, %v406
  %v471 = vmul.f32 %v455, %v407
  %v472 = vmul.f32 %v456, %v408
  %v473 = vmul.f32 %v457, %v409
  %v474 = vmul.f32 %v458, %v410
  %v475 = vmul.f32 %v459, %v411
  %v476 = vmul.f32 %v460, %v412
  %v477 = vmul.f32 %v461, %v413
  %v478 = vmul.f32 %v462, %v414
  %v479 = vmul.f32 %v463, %v415
  %v480 = vld [vmem:[%s1] sm:$0xff]
  %s481 = scalar_lea.vmem %s1, 8
  %v482 = vld [vmem:[%s481] sm:$0xff]
  %v484 = vsel %vm47, %v464, 0
  %v487 = vsel %vm47, %v465, 0
  %v490 = vsel %vm47, %v466, 0
  %v493 = vsel %vm47, %v467, 0
  %v496 = vsel %vm47, %v468, 0
  %v499 = vsel %vm47, %v469, 0
  %v502 = vsel %vm47, %v470, 0
  %v505 = vsel %vm47, %v471, 0
  %v508 = vsel %vm47, %v472, 0
  %v511 = vsel %vm47, %v473, 0
  %v514 = vsel %vm47, %v474, 0
  %v517 = vsel %vm47, %v475, 0
  %v520 = vsel %vm47, %v476, 0
  %v523 = vsel %vm47, %v477, 0
  %v526 = vsel %vm47, %v478, 0
  %v529 = vsel %vm47, %v479, 0
  %531 = vmatprep.subr.mxu0 0.0
  %532 = vmatpush1.msra.mxu0 %v482
  %533 = vmatprep.subr.mxu0 0.0
  %534 = vmatpush1.msra.mxu0 0.0
  %535 = vmatprep.subr.mxu0 0.0
  %536 = vmatpush1.msra.mxu0 0.0
  %537 = vmatprep.subr.mxu0 0.0
  %538 = vmatpush1.msra.mxu0 0.0
  %539 = vmatprep.subr.mxu0 0.0
  %540 = vmatpush1.msra.mxu0 0.0
  %541 = vmatprep.subr.mxu0 0.0
  %542 = vmatpush1.msra.mxu0 0.0
  %543 = vmatprep.subr.mxu0 0.0
  %544 = vmatpush1.msra.mxu0 0.0
  %545 = vmatprep.subr.mxu0 0.0
  %546 = vmatpush1.msra.mxu0 0.0
  %547 = vmatprep.subr.mxu0 0.0
  %548 = vmatpush1.msra.mxu0 0.0
  %549 = vmatprep.subr.mxu0 0.0
  %550 = vmatpush1.msra.mxu0 0.0
  %551 = vmatprep.subr.mxu0 0.0
  %552 = vmatpush1.msra.mxu0 0.0
  %553 = vmatprep.subr.mxu0 0.0
  %554 = vmatpush1.msra.mxu0 0.0
  %555 = vmatprep.subr.mxu0 0.0
  %556 = vmatpush1.msra.mxu0 0.0
  %557 = vmatprep.subr.mxu0 0.0
  %558 = vmatpush1.msra.mxu0 0.0
  %559 = vmatprep.subr.mxu0 0.0
  %560 = vmatpush1.msra.mxu0 0.0
  %561 = vmatprep.subr.mxu0 0.0
  %562 = vmatpush1.msra.mxu0 0.0
  %563 = vmatprep.subr.mxu0 0.0
  %564 = vmatpush1.msra.mxu0 0.0
  %565 = vmatprep.subr.mxu0 0.0
  %566 = vmatpush1.msra.mxu0 0.0
  %567 = vmatprep.subr.mxu0 0.0
  %568 = vmatpush1.msra.mxu0 0.0
  %569 = vmatprep.subr.mxu0 0.0
  %570 = vmatpush1.msra.mxu0 0.0
  %571 = vmatprep.subr.mxu0 0.0
  %572 = vmatpush1.msra.mxu0 0.0
  %573 = vmatprep.subr.mxu0 0.0
  %574 = vmatpush1.msra.mxu0 0.0
  %575 = vmatprep.subr.mxu0 0.0
  %576 = vmatpush1.msra.mxu0 0.0
  %577 = vmatprep.subr.mxu0 0.0
  %578 = vmatpush1.msra.mxu0 0.0
  %579 = vmatprep.subr.mxu0 0.0
  %580 = vmatpush1.msra.mxu0 0.0
  %581 = vmatprep.subr.mxu0 0.0
  %582 = vmatpush1.msra.mxu0 0.0
  %583 = vmatprep.subr.mxu0 0.0
  %584 = vmatpush1.msra.mxu0 0.0
  %585 = vmatprep.subr.mxu0 0.0
  %586 = vmatpush1.msra.mxu0 0.0
  %587 = vmatprep.subr.mxu0 0.0
  %588 = vmatpush1.msra.mxu0 0.0
  %589 = vmatprep.subr.mxu0 0.0
  %590 = vmatpush1.msra.mxu0 0.0
  %591 = vmatprep.subr.mxu0 0.0
  %592 = vmatpush1.msra.mxu0 0.0
  %593 = vmatprep.subr.mxu0 0.0
  %594 = vmatpush1.msra.mxu0 0.0
  %595 = vmatprep.mubr.f32.mxu0 0.0
  %596 = vmatmul.mubr.f32.gmra.mrb[0].mxu0 %v484
  %v597 = vpop.f32.mrb[0].mxu0
  %v598 = vadd.f32 0.0, %v597
  %v599 = vpop.f32.mrb[0].mxu0
  %600 = vmatprep.mubr.f32.mxu0 0.0
  %601 = vmatmul.mubr.f32.gmra.mrb[0].mxu0 %v487
  %v602 = vpop.f32.mrb[0].mxu0
  %v603 = vadd.f32 0.0, %v602
  %v604 = vpop.f32.mrb[0].mxu0
  %605 = vmatprep.mubr.f32.mxu0 0.0
  %606 = vmatmul.mubr.f32.gmra.mrb[0].mxu0 %v490
  %v607 = vpop.f32.mrb[0].mxu0
  %v608 = vadd.f32 0.0, %v607
  %v609 = vpop.f32.mrb[0].mxu0
  %610 = vmatprep.mubr.f32.mxu0 0.0
  %611 = vmatmul.mubr.f32.gmra.mrb[0].mxu0 %v493
  %v612 = vpop.f32.mrb[0].mxu0
  %v613 = vadd.f32 0.0, %v612
  %v614 = vpop.f32.mrb[0].mxu0
  %615 = vmatprep.mubr.f32.mxu0 0.0
  %616 = vmatmul.mubr.f32.gmra.mrb[0].mxu0 %v496
  %v617 = vpop.f32.mrb[0].mxu0
  %v618 = vadd.f32 0.0, %v617
  %v619 = vpop.f32.mrb[0].mxu0
  %620 = vmatprep.mubr.f32.mxu0 0.0
  %621 = vmatmul.mubr.f32.gmra.mrb[0].mxu0 %v499
  %v622 = vpop.f32.mrb[0].mxu0
  %v623 = vadd.f32 0.0, %v622
  %v624 = vpop.f32.mrb[0].mxu0
  %625 = vmatprep.mubr.f32.mxu0 0.0
  %626 = vmatmul.mubr.f32.gmra.mrb[0].mxu0 %v502
  %v627 = vpop.f32.mrb[0].mxu0
  %v628 = vadd.f32 0.0, %v627
  %v629 = vpop.f32.mrb[0].mxu0
  %630 = vmatprep.mubr.f32.mxu0 0.0
  %631 = vmatmul.mubr.f32.gmra.mrb[0].mxu0 %v505
  %v632 = vpop.f32.mrb[0].mxu0
  %v633 = vadd.f32 0.0, %v632
  %v634 = vpop.f32.mrb[0].mxu0
  %635 = vmatprep.mubr.f32.mxu0 0.0
  %636 = vmatmul.mubr.f32.gmra.mrb[0].mxu0 %v508
  %v637 = vpop.f32.mrb[0].mxu0
  %v638 = vadd.f32 0.0, %v637
  %v639 = vpop.f32.mrb[0].mxu0
  %640 = vmatprep.mubr.f32.mxu0 0.0
  %641 = vmatmul.mubr.f32.gmra.mrb[0].mxu0 %v511
  %v642 = vpop.f32.mrb[0].mxu0
  %v643 = vadd.f32 0.0, %v642
  %v644 = vpop.f32.mrb[0].mxu0
  %645 = vmatprep.mubr.f32.mxu0 0.0
  %646 = vmatmul.mubr.f32.gmra.mrb[0].mxu0 %v514
  %v647 = vpop.f32.mrb[0].mxu0
  %v648 = vadd.f32 0.0, %v647
  %v649 = vpop.f32.mrb[0].mxu0
  %650 = vmatprep.mubr.f32.mxu0 0.0
  %651 = vmatmul.mubr.f32.gmra.mrb[0].mxu0 %v517
  %v652 = vpop.f32.mrb[0].mxu0
  %v653 = vadd.f32 0.0, %v652
  %v654 = vpop.f32.mrb[0].mxu0
  %655 = vmatprep.mubr.f32.mxu0 0.0
  %656 = vmatmul.mubr.f32.gmra.mrb[0].mxu0 %v520
  %v657 = vpop.f32.mrb[0].mxu0
  %v658 = vadd.f32 0.0, %v657
  %v659 = vpop.f32.mrb[0].mxu0
  %660 = vmatprep.mubr.f32.mxu0 0.0
  %661 = vmatmul.mubr.f32.gmra.mrb[0].mxu0 %v523
  %v662 = vpop.f32.mrb[0].mxu0
  %v663 = vadd.f32 0.0, %v662
  %v664 = vpop.f32.mrb[0].mxu0
  %665 = vmatprep.mubr.f32.mxu0 0.0
  %666 = vmatmul.mubr.f32.gmra.mrb[0].mxu0 %v526
  %v667 = vpop.f32.mrb[0].mxu0
  %v668 = vadd.f32 0.0, %v667
  %v669 = vpop.f32.mrb[0].mxu0
  %670 = vmatprep.mubr.f32.mxu0 0.0
  %671 = vmatmul.mubr.f32.gmra.mrb[0].mxu0 %v529
  %v672 = vpop.f32.mrb[0].mxu0
  %v673 = vadd.f32 0.0, %v672
  %v674 = vpop.f32.mrb[0].mxu0
  %675 = vdwg.mxu0
  %v677 = vsel %vm47, %v432, 0
  %v680 = vsel %vm47, %v433, 0
  %v683 = vsel %vm47, %v434, 0
  %v686 = vsel %vm47, %v435, 0
  %v689 = vsel %vm47, %v436, 0
  %v692 = vsel %vm47, %v437, 0
  %v695 = vsel %vm47, %v438, 0
  %v698 = vsel %vm47, %v439, 0
  %v701 = vsel %vm47, %v440, 0
  %v704 = vsel %vm47, %v441, 0
  %v707 = vsel %vm47, %v442, 0
  %v710 = vsel %vm47, %v443, 0
  %v713 = vsel %vm47, %v444, 0
  %v716 = vsel %vm47, %v445, 0
  %v719 = vsel %vm47, %v446, 0
  %v722 = vsel %vm47, %v447, 0
  %724 = vmatprep.subr.mxu0 0.0
  %725 = vmatpush1.msra.mxu0 %v480
  %726 = vmatprep.subr.mxu0 0.0
  %727 = vmatpush1.msra.mxu0 0.0
  %728 = vmatprep.subr.mxu0 0.0
  %729 = vmatpush1.msra.mxu0 0.0
  %730 = vmatprep.subr.mxu0 0.0
  %731 = vmatpush1.msra.mxu0 0.0
  %732 = vmatprep.subr.mxu0 0.0
  %733 = vmatpush1.msra.mxu0 0.0
  %734 = vmatprep.subr.mxu0 0.0
  %735 = vmatpush1.msra.mxu0 0.0
  %736 = vmatprep.subr.mxu0 0.0
  %737 = vmatpush1.msra.mxu0 0.0
  %738 = vmatprep.subr.mxu0 0.0
  %739 = vmatpush1.msra.mxu0 0.0
  %740 = vmatprep.subr.mxu0 0.0
  %741 = vmatpush1.msra.mxu0 0.0
  %742 = vmatprep.subr.mxu0 0.0
  %743 = vmatpush1.msra.mxu0 0.0
  %744 = vmatprep.subr.mxu0 0.0
  %745 = vmatpush1.msra.mxu0 0.0
  %746 = vmatprep.subr.mxu0 0.0
  %747 = vmatpush1.msra.mxu0 0.0
  %748 = vmatprep.subr.mxu0 0.0
  %749 = vmatpush1.msra.mxu0 0.0
  %750 = vmatprep.subr.mxu0 0.0
  %751 = vmatpush1.msra.mxu0 0.0
  %752 = vmatprep.subr.mxu0 0.0
  %753 = vmatpush1.msra.mxu0 0.0
  %754 = vmatprep.subr.mxu0 0.0
  %755 = vmatpush1.msra.mxu0 0.0
  %756 = vmatprep.subr.mxu0 0.0
  %757 = vmatpush1.msra.mxu0 0.0
  %758 = vmatprep.subr.mxu0 0.0
  %759 = vmatpush1.msra.mxu0 0.0
  %760 = vmatprep.subr.mxu0 0.0
  %761 = vmatpush1.msra.mxu0 0.0
  %762 = vmatprep.subr.mxu0 0.0
  %763 = vmatpush1.msra.mxu0 0.0
  %764 = vmatprep.subr.mxu0 0.0
  %765 = vmatpush1.msra.mxu0 0.0
  %766 = vmatprep.subr.mxu0 0.0
  %767 = vmatpush1.msra.mxu0 0.0
  %768 = vmatprep.subr.mxu0 0.0
  %769 = vmatpush1.msra.mxu0 0.0
  %770 = vmatprep.subr.mxu0 0.0
  %771 = vmatpush1.msra.mxu0 0.0
  %772 = vmatprep.subr.mxu0 0.0
  %773 = vmatpush1.msra.mxu0 0.0
  %774 = vmatprep.subr.mxu0 0.0
  %775 = vmatpush1.msra.mxu0 0.0
  %776 = vmatprep.subr.mxu0 0.0
  %777 = vmatpush1.msra.mxu0 0.0
  %778 = vmatprep.subr.mxu0 0.0
  %779 = vmatpush1.msra.mxu0 0.0
  %780 = vmatprep.subr.mxu0 0.0
  %781 = vmatpush1.msra.mxu0 0.0
  %782 = vmatprep.subr.mxu0 0.0
  %783 = vmatpush1.msra.mxu0 0.0
  %784 = vmatprep.subr.mxu0 0.0
  %785 = vmatpush1.msra.mxu0 0.0
  %786 = vmatprep.subr.mxu0 0.0
  %787 = vmatpush1.msra.mxu0 0.0
  %788 = vmatprep.mubr.f32.mxu0 0.0
  %789 = vmatmul.mubr.f32.gmra.mrb[0].mxu0 %v677
  %v790 = vpop.f32.mrb[0].mxu0
  %v791 = vadd.f32 %v598, %v790
  %v792 = vpop.f32.mrb[0].mxu0
  %793 = vmatprep.mubr.f32.mxu0 0.0
  %794 = vmatmul.mubr.f32.gmra.mrb[0].mxu0 %v680
  %v795 = vpop.f32.mrb[0].mxu0
  %v796 = vadd.f32 %v603, %v795
  %v797 = vpop.f32.mrb[0].mxu0
  %798 = vmatprep.mubr.f32.mxu0 0.0
  %799 = vmatmul.mubr.f32.gmra.mrb[0].mxu0 %v683
  %v800 = vpop.f32.mrb[0].mxu0
  %v801 = vadd.f32 %v608, %v800
  %v802 = vpop.f32.mrb[0].mxu0
  %803 = vmatprep.mubr.f32.mxu0 0.0
  %804 = vmatmul.mubr.f32.gmra.mrb[0].mxu0 %v686
  %v805 = vpop.f32.mrb[0].mxu0
  %v806 = vadd.f32 %v613, %v805
  %v807 = vpop.f32.mrb[0].mxu0
  %808 = vmatprep.mubr.f32.mxu0 0.0
  %809 = vmatmul.mubr.f32.gmra.mrb[0].mxu0 %v689
  %v810 = vpop.f32.mrb[0].mxu0
  %v811 = vadd.f32 %v618, %v810
  %v812 = vpop.f32.mrb[0].mxu0
  %813 = vmatprep.mubr.f32.mxu0 0.0
  %814 = vmatmul.mubr.f32.gmra.mrb[0].mxu0 %v692
  %v815 = vpop.f32.mrb[0].mxu0
  %v816 = vadd.f32 %v623, %v815
  %v817 = vpop.f32.mrb[0].mxu0
  %818 = vmatprep.mubr.f32.mxu0 0.0
  %819 = vmatmul.mubr.f32.gmra.mrb[0].mxu0 %v695
  %v820 = vpop.f32.mrb[0].mxu0
  %v821 = vadd.f32 %v628, %v820
  %v822 = vpop.f32.mrb[0].mxu0
  %823 = vmatprep.mubr.f32.mxu0 0.0
  %824 = vmatmul.mubr.f32.gmra.mrb[0].mxu0 %v698
  %v825 = vpop.f32.mrb[0].mxu0
  %v826 = vadd.f32 %v633, %v825
  %v827 = vpop.f32.mrb[0].mxu0
  %828 = vmatprep.mubr.f32.mxu0 0.0
  %829 = vmatmul.mubr.f32.gmra.mrb[0].mxu0 %v701
  %v830 = vpop.f32.mrb[0].mxu0
  %v831 = vadd.f32 %v638, %v830
  %v832 = vpop.f32.mrb[0].mxu0
  %833 = vmatprep.mubr.f32.mxu0 0.0
  %834 = vmatmul.mubr.f32.gmra.mrb[0].mxu0 %v704
  %v835 = vpop.f32.mrb[0].mxu0
  %v836 = vadd.f32 %v643, %v835
  %v837 = vpop.f32.mrb[0].mxu0
  %838 = vmatprep.mubr.f32.mxu0 0.0
  %839 = vmatmul.mubr.f32.gmra.mrb[0].mxu0 %v707
  %v840 = vpop.f32.mrb[0].mxu0
  %v841 = vadd.f32 %v648, %v840
  %v842 = vpop.f32.mrb[0].mxu0
  %843 = vmatprep.mubr.f32.mxu0 0.0
  %844 = vmatmul.mubr.f32.gmra.mrb[0].mxu0 %v710
  %v845 = vpop.f32.mrb[0].mxu0
  %v846 = vadd.f32 %v653, %v845
  %v847 = vpop.f32.mrb[0].mxu0
  %848 = vmatprep.mubr.f32.mxu0 0.0
  %849 = vmatmul.mubr.f32.gmra.mrb[0].mxu0 %v713
  %v850 = vpop.f32.mrb[0].mxu0
  %v851 = vadd.f32 %v658, %v850
  %v852 = vpop.f32.mrb[0].mxu0
  %853 = vmatprep.mubr.f32.mxu0 0.0
  %854 = vmatmul.mubr.f32.gmra.mrb[0].mxu0 %v716
  %v855 = vpop.f32.mrb[0].mxu0
  %v856 = vadd.f32 %v663, %v855
  %v857 = vpop.f32.mrb[0].mxu0
  %858 = vmatprep.mubr.f32.mxu0 0.0
  %859 = vmatmul.mubr.f32.gmra.mrb[0].mxu0 %v719
  %v860 = vpop.f32.mrb[0].mxu0
  %v861 = vadd.f32 %v668, %v860
  %v862 = vpop.f32.mrb[0].mxu0
  %863 = vmatprep.mubr.f32.mxu0 0.0
  %864 = vmatmul.mubr.f32.gmra.mrb[0].mxu0 %v722
  %v865 = vpop.f32.mrb[0].mxu0
  %v866 = vadd.f32 %v673, %v865
  %v867 = vpop.f32.mrb[0].mxu0
  %868 = vdwg.mxu0
  %v869 = vld [vmem:[%s2] sm:$0x1]
  %v871 = vlaneseq
  %v872 = vshrl.u32 %v871, 7
  %v873 = vsub.s32 0, %v872
  %v874 = vrot.slane %v869, %v873
  %v876 = vadd.f32 %v791, %v874
  %v877 = vadd.f32 %v796, %v874
  %v878 = vadd.f32 %v801, %v874
  %v879 = vadd.f32 %v806, %v874
  %v880 = vadd.f32 %v811, %v874
  %v881 = vadd.f32 %v816, %v874
  %v882 = vadd.f32 %v821, %v874
  %v883 = vadd.f32 %v826, %v874
  %v884 = vadd.f32 %v831, %v874
  %v885 = vadd.f32 %v836, %v874
  %v886 = vadd.f32 %v841, %v874
  %v887 = vadd.f32 %v846, %v874
  %v888 = vadd.f32 %v851, %v874
  %v889 = vadd.f32 %v856, %v874
  %v890 = vadd.f32 %v861, %v874
  %v891 = vadd.f32 %v866, %v874
  %892 = vst.msk [vmem:[%s3] sm:$0xff] %vm47, %v876
  %893 = vst.msk [vmem:[%s3 + $0x8] sm:$0xff] %vm47, %v877
  %894 = vst.msk [vmem:[%s3 + $0x10] sm:$0xff] %vm47, %v878
  %895 = vst.msk [vmem:[%s3 + $0x18] sm:$0xff] %vm47, %v879
  %896 = vst.msk [vmem:[%s3 + $0x20] sm:$0xff] %vm47, %v880
  %897 = vst.msk [vmem:[%s3 + $0x28] sm:$0xff] %vm47, %v881
  %898 = vst.msk [vmem:[%s3 + $0x30] sm:$0xff] %vm47, %v882
  %899 = vst.msk [vmem:[%s3 + $0x38] sm:$0xff] %vm47, %v883
  %900 = vst.msk [vmem:[%s3 + $0x40] sm:$0xff] %vm47, %v884
  %901 = vst.msk [vmem:[%s3 + $0x48] sm:$0xff] %vm47, %v885
  %902 = vst.msk [vmem:[%s3 + $0x50] sm:$0xff] %vm47, %v886
  %903 = vst.msk [vmem:[%s3 + $0x58] sm:$0xff] %vm47, %v887
  %904 = vst.msk [vmem:[%s3 + $0x60] sm:$0xff] %vm47, %v888
  %905 = vst.msk [vmem:[%s3 + $0x68] sm:$0xff] %vm47, %v889
  %906 = vst.msk [vmem:[%s3 + $0x70] sm:$0xff] %vm47, %v890
  %907 = vst.msk [vmem:[%s3 + $0x78] sm:$0xff] %vm47, %v891
  // Predicated region
  $region14: #{tpu_custom_call.1} parent=0 // pred_check
    _
  $region15: #{tpu_custom_call.1} parent=0 // pred_check_branch
    %909 = sbr.rel (0) target = $region17
  $region16: #{tpu_custom_call.1} parent=0 // pred_region
    _
  $region17: #{tpu_custom_call.1} parent=0 // pred_fallthru
    _
  // Predicated region
  $region18: #{tpu_custom_call.1} parent=0 // pred_check
    _
  $region19: #{tpu_custom_call.1} parent=0 // pred_check_branch
    %911 = sbr.rel (0) target = $region21
  $region20: #{tpu_custom_call.1} parent=0 // pred_region
    _
  $region21: #{tpu_custom_call.1} parent=0 // pred_fallthru
    _

</llo_original>
